<compile_context>
chip_gen: v5e
topology: v5e:2x2
jax: 0.10.0
libtpu: 0.0.40
codegen_flags: <defaults>
</compile_context>

<pallas_src>
import functools

import jax
import jax.numpy as jnp
from jax.experimental import pallas as pl
from jax.experimental.pallas import tpu as pltpu


# --------------------------------------------------------------------------
# Kernels
# --------------------------------------------------------------------------

def _rmsnorm_group_kernel_matmul(seg_ref, exp_ref, w_ref, x_ref, o_ref, *,
                                 inv_gs, eps):
    """General path: segmented reduction on the MXU (any group_size).

    seg_ref: (H, G) 0/1 block-diagonal matrix (column g selects group g)
    exp_ref: (G, H) 0/1 block-diagonal matrix (row g broadcasts group g)
    w_ref:   (1, H) f32 weight
    x_ref:   (TR, H) input block, o_ref: (TR, H) output block
    """
    x = x_ref[...].astype(jnp.float32)
    sq = x * x
    # Per-group sum of squares without splitting the lane axis: (TR, G).
    sumsq = jnp.dot(sq, seg_ref[...], preferred_element_type=jnp.float32)
    inv_rms = jax.lax.rsqrt(sumsq * inv_gs + eps)                 # (TR, G)
    # Expand back to (TR, H) on the MXU (no lane-axis reshape / relayout).
    inv_full = jnp.dot(inv_rms, exp_ref[...], preferred_element_type=jnp.float32)
    o_ref[...] = (x * inv_full * w_ref[...]).astype(o_ref.dtype)


def _rmsnorm_group_kernel_sliced(w_ref, x_ref, o_ref, *,
                                 num_groups, group_size, inv_gs, eps):
    """group_size % 128 == 0 path: 128-aligned static lane slices, no reshape."""
    for g in range(num_groups):
        lo, hi = g * group_size, (g + 1) * group_size
        xs = x_ref[:, lo:hi].astype(jnp.float32)
        sumsq = jnp.sum(xs * xs, axis=-1, keepdims=True)
        inv_rms = jax.lax.rsqrt(sumsq * inv_gs + eps)
        o_ref[:, lo:hi] = (xs * inv_rms * w_ref[:, lo:hi]).astype(o_ref.dtype)


# --------------------------------------------------------------------------
# Tiling
# --------------------------------------------------------------------------

def _round_up(x, m):
    return ((x + m - 1) // m) * m


def _pick_row_tile(rows, hidden, itemsize):
    # Each I/O block capped at ~4 MiB: mem-bound kernels already reach ~85% of
    # HBM roofline at 1-4 MiB blocks; bigger blocks only crowd VMEM and hurt
    # pipeline overlap on v7x.
    io_cap = (4 * 1024 * 1024) // max(hidden * itemsize, 1)
    # Total per-step budget ~12 MiB: 2x in + 2x out (double-buffered, io dtype)
    # plus ~3 f32-sized temporaries materialized by the body.
    bytes_per_row = hidden * (4 * itemsize + 3 * 4)
    vmem_cap = (12 * 1024 * 1024) // max(bytes_per_row, 1)
    tile = max(min(io_cap, vmem_cap), 8)
    # Keep >= 8 grid steps when rows allow (>= 4 per TensorCore on v7x) so the
    # parallel axis shards across both cores AND each core pipelines in steady
    # state (prologue/epilogue not exposed).
    tile = min(tile, max(_round_up(pl.cdiv(rows, 8), 8), 8))
    # Multiple of 16 keeps bf16 sublane packing dense (8 is fine for f32).
    if tile >= 16:
        tile = (tile // 16) * 16
    else:
        tile = 8
    return tile


# --------------------------------------------------------------------------
# Wrapper
# --------------------------------------------------------------------------

def rmsnorm_group(x, weight, num_groups, eps=1e-5, *, row_tile=None):
    """Grouped RMSNorm. x: (..., hidden), weight: (hidden,). Same shape/dtype out."""
    orig_shape = x.shape
    hidden = orig_shape[-1]
    assert hidden % num_groups == 0
    group_size = hidden // num_groups
    inv_gs = 1.0 / float(group_size)
    # TODO(synk): for very large hidden (>=16K), add a second grid axis tiling
    # the hidden dim in whole-group 128-aligned chunks instead of spanning it.

    x2 = x.reshape(-1, hidden)
    rows = x2.shape[0]
    itemsize = jnp.dtype(x.dtype).itemsize

    tile = row_tile if row_tile is not None else _pick_row_tile(rows, hidden, itemsize)
    grid = (pl.cdiv(rows, tile),)   # ragged last block handled/masked by Pallas

    # Weight in f32: the multiply is done in f32 and downcast once (v5e has no
    # bf16 VALU; neutral-to-positive on v6e/v7x).
    w2 = weight.reshape(1, hidden).astype(jnp.float32)

    # Safe on every generation (v7x: 64 MiB physical per TC).
    vmem_limit = 32 * 1024 * 1024
    compiler_params = pltpu.CompilerParams(
        dimension_semantics=("parallel",),
        vmem_limit_bytes=vmem_limit,
    )

    x_spec = pl.BlockSpec((tile, hidden), lambda i: (i, 0))
    w_spec = pl.BlockSpec((1, hidden), lambda i: (0, 0))
    o_spec = pl.BlockSpec((tile, hidden), lambda i: (i, 0))
    out_shape = jax.ShapeDtypeStruct((rows, hidden), x.dtype)

    if group_size % 128 == 0:
        # Lane-dense per-group slices: no reshape, no MXU needed.
        kernel = functools.partial(
            _rmsnorm_group_kernel_sliced,
            num_groups=num_groups, group_size=group_size,
            inv_gs=inv_gs, eps=eps,
        )
        out = pl.pallas_call(
            kernel,
            out_shape=out_shape,
            grid_spec=pltpu.PrefetchScalarGridSpec(
                num_scalar_prefetch=0,
                grid=grid,
                in_specs=[w_spec, x_spec],
                out_specs=o_spec,
            ),
            compiler_params=compiler_params,
        )(w2, x2)
    else:
        # Segmented reduction on the MXU (works for any group_size).
        gi = jnp.arange(hidden) // group_size                       # (H,)
        seg = (gi[:, None] == jnp.arange(num_groups)[None, :]).astype(jnp.float32)  # (H, G)
        expd = seg.T                                                # (G, H)
        seg_spec = pl.BlockSpec((hidden, num_groups), lambda i: (0, 0))
        exp_spec = pl.BlockSpec((num_groups, hidden), lambda i: (0, 0))
        kernel = functools.partial(
            _rmsnorm_group_kernel_matmul, inv_gs=inv_gs, eps=eps,
        )
        out = pl.pallas_call(
            kernel,
            out_shape=out_shape,
            grid_spec=pltpu.PrefetchScalarGridSpec(
                num_scalar_prefetch=0,
                grid=grid,
                in_specs=[seg_spec, exp_spec, w_spec, x_spec],
                out_specs=o_spec,
            ),
            compiler_params=compiler_params,
        )(seg, expd, w2, x2)

    return out.reshape(orig_shape)


# --------------------------------------------------------------------------
# Reference + test
# --------------------------------------------------------------------------

def _reference(x, weight, num_groups, eps=1e-5):
    hidden = x.shape[-1]
    group_size = hidden // num_groups
    y = x.astype(jnp.float32)
    orig = y.shape
    y = y.reshape(*orig[:-1], num_groups, group_size)
    var = jnp.mean(y * y, axis=-1, keepdims=True)
    y = y * jax.lax.rsqrt(var + eps)
    y = y.reshape(orig)
    return (weight * y.astype(x.dtype)).astype(x.dtype)


def _assert_close(out, ref, name):
    o = out.astype(jnp.float32)
    r = ref.astype(jnp.float32)
    # kernel multiplies in f32 then casts once (vs torch cast-then-bf16-mul);
    # allow ~1 bf16 ulp at the output magnitude.
    err = jnp.max(jnp.abs(o - r))
    tol = 2e-2 * (1.0 + float(jnp.max(jnp.abs(r))))
    assert float(err) < tol, f"{name}: max abs error {float(err)} (tol {tol})"


if __name__ == "__main__":
    key = jax.random.PRNGKey(0)
    kx, kw, kx2, kw2 = jax.random.split(key, 4)

    # Small shapes consistent with the module: batch=2, seq=8, hidden=32, 4 groups
    # (group_size=8 -> exercises the MXU segmented-reduction path).
    batch, seq, hidden, num_groups = 2, 8, 32, 4
    x = jax.random.normal(kx, (batch, seq, hidden), dtype=jnp.float32).astype(jnp.bfloat16)
    weight = (1.0 + 0.01 * jax.random.normal(kw, (hidden,), dtype=jnp.float32)).astype(jnp.bfloat16)

    out = jax.block_until_ready(rmsnorm_group(x, weight, num_groups, eps=1e-5))
    assert out.shape == x.shape and out.dtype == x.dtype
    _assert_close(out, _reference(x, weight, num_groups), "matmul path")

    # Ragged row count (grid cdiv path, masked last block).
    x_odd = jax.random.normal(kx2, (3, 5, hidden), dtype=jnp.float32).astype(jnp.bfloat16)
    out_odd = jax.block_until_ready(rmsnorm_group(x_odd, weight, num_groups, eps=1e-5))
    _assert_close(out_odd, _reference(x_odd, weight, num_groups), "ragged rows")

    # group_size % 128 == 0 -> exercises the lane-sliced path.
    hidden2, num_groups2 = 256, 2
    x_big = jax.random.normal(kx2, (2, 4, hidden2), dtype=jnp.float32).astype(jnp.bfloat16)
    weight2 = (1.0 + 0.01 * jax.random.normal(kw2, (hidden2,), dtype=jnp.float32)).astype(jnp.bfloat16)
    out_big = jax.block_until_ready(rmsnorm_group(x_big, weight2, num_groups2, eps=1e-5))
    _assert_close(out_big, _reference(x_big, weight2, num_groups2), "sliced path")

    print("KERNEL_OK")
</pallas_src>

<mosaic_0001>
module attributes {stable_mosaic.version = 11 : i64} {
  func.func @_rmsnorm_group_kernel_matmul(%arg0: i32, %arg1: memref<32x4xf32, #tpu.memory_space<vmem>>, %arg2: memref<4x32xf32, #tpu.memory_space<vmem>>, %arg3: memref<1x32xf32, #tpu.memory_space<vmem>>, %arg4: memref<8x32xbf16, #tpu.memory_space<vmem>>, %arg5: memref<8x32xbf16, #tpu.memory_space<vmem>>) attributes {dimension_semantics = [#tpu.dimension_semantics<parallel>], iteration_bounds = array<i64: 2>, scalar_prefetch = 0 : i64, scratch_operands = 0 : i64, tpu.core_type = #tpu.core_type<tc>, window_params = [{pipeline_mode = #tpu.pipeline_mode<synchronous>, transform_indices = @transform_0, window_bounds = array<i64: 32, 4>}, {pipeline_mode = #tpu.pipeline_mode<synchronous>, transform_indices = @transform_1, window_bounds = array<i64: 4, 32>}, {pipeline_mode = #tpu.pipeline_mode<synchronous>, transform_indices = @transform_2, window_bounds = array<i64: 1, 32>}, {transform_indices = @transform_3, window_bounds = array<i64: 8, 32>}, {transform_indices = @transform_4, window_bounds = array<i64: 8, 32>}]} {
    %c0 = arith.constant 0 : index
    %c0_0 = arith.constant 0 : index
    %0 = vector.load %arg4[%c0, %c0_0] : memref<8x32xbf16, #tpu.memory_space<vmem>>, vector<8x32xbf16>
    %1 = arith.extf %0 : vector<8x32xbf16> to vector<8x32xf32>
    %2 = arith.mulf %1, %1 : vector<8x32xf32>
    %c0_1 = arith.constant 0 : index
    %c0_2 = arith.constant 0 : index
    %3 = vector.load %arg1[%c0_1, %c0_2] : memref<32x4xf32, #tpu.memory_space<vmem>>, vector<32x4xf32>
    %cst = arith.constant dense<0.000000e+00> : vector<8x4xf32>
    %4 = tpu.matmul %2, %3, %cst {dimension_numbers = #tpu.dot_dimension_numbers<[1], [0], [0], [1], [0, 0, 1, 1], [], []>} : vector<8x32xf32>, vector<32x4xf32>, vector<8x4xf32> -> vector<8x4xf32>
    %cst_3 = arith.constant 1.250000e-01 : f32
    %5 = vector.broadcast %cst_3 : f32 to vector<8x4xf32>
    %6 = arith.mulf %4, %5 : vector<8x4xf32>
    %cst_4 = arith.constant 9.99999974E-6 : f32
    %7 = vector.broadcast %cst_4 : f32 to vector<8x4xf32>
    %8 = arith.addf %6, %7 : vector<8x4xf32>
    %9 = math.rsqrt %8 : vector<8x4xf32>
    %c0_5 = arith.constant 0 : index
    %c0_6 = arith.constant 0 : index
    %10 = vector.load %arg2[%c0_5, %c0_6] : memref<4x32xf32, #tpu.memory_space<vmem>>, vector<4x32xf32>
    %cst_7 = arith.constant dense<0.000000e+00> : vector<8x32xf32>
    %11 = tpu.matmul %9, %10, %cst_7 {dimension_numbers = #tpu.dot_dimension_numbers<[1], [0], [0], [1], [0, 0, 1, 1], [], []>} : vector<8x4xf32>, vector<4x32xf32>, vector<8x32xf32> -> vector<8x32xf32>
    %12 = arith.mulf %1, %11 : vector<8x32xf32>
    %c0_8 = arith.constant 0 : index
    %c0_9 = arith.constant 0 : index
    %13 = vector.load %arg3[%c0_8, %c0_9] : memref<1x32xf32, #tpu.memory_space<vmem>>, vector<1x32xf32>
    %14 = vector.broadcast %13 : vector<1x32xf32> to vector<8x32xf32>
    %15 = arith.mulf %12, %14 : vector<8x32xf32>
    %16 = arith.truncf %15 : vector<8x32xf32> to vector<8x32xbf16>
    %c0_10 = arith.constant 0 : index
    %c0_11 = arith.constant 0 : index
    %17 = vector.load %arg5[%c0_10, %c0_11] : memref<8x32xbf16, #tpu.memory_space<vmem>>, vector<8x32xbf16>
    tpu.vector_store %arg5[%c0_10, %c0_11], %16 {strides = array<i32>} : memref<8x32xbf16, #tpu.memory_space<vmem>>, vector<8x32xbf16>,
    return
  }
  func.func @transform_0(%arg0: i32) -> (i32, i32) {
    %c0_i32 = arith.constant 0 : i32
    %c0_i32_0 = arith.constant 0 : i32
    %c0_i32_1 = arith.constant 0 : i32
    return %c0_i32, %c0_i32_0 : i32, i32
  }
  func.func @transform_1(%arg0: i32) -> (i32, i32) {
    %c0_i32 = arith.constant 0 : i32
    %c0_i32_0 = arith.constant 0 : i32
    %c0_i32_1 = arith.constant 0 : i32
    return %c0_i32, %c0_i32_0 : i32, i32
  }
  func.func @transform_2(%arg0: i32) -> (i32, i32) {
    %c0_i32 = arith.constant 0 : i32
    %c0_i32_0 = arith.constant 0 : i32
    %c0_i32_1 = arith.constant 0 : i32
    return %c0_i32, %c0_i32_0 : i32, i32
  }
  func.func @transform_3(%arg0: i32) -> (i32, i32) {
    %c0_i32 = arith.constant 0 : i32
    %c0_i32_0 = arith.constant 0 : i32
    return %arg0, %c0_i32 : i32, i32
  }
  func.func @transform_4(%arg0: i32) -> (i32, i32) {
    %c0_i32 = arith.constant 0 : i32
    %c0_i32_0 = arith.constant 0 : i32
    return %arg0, %c0_i32 : i32, i32
  }
}

</mosaic_0001>

<llo_original>
// kernel: tpu_custom_call.1
$region0: #{tpu_custom_call.1}
  #allocation0 [shape = 'u32[]', space=smem, size = 0x4, offset = 0x4, fixed_abs, tag = 'smem constant byte address 0x4 - core index']
  #allocation1 [shape = 'u32[72,128]{1,0:T(1,128)}', space=vmem, size = 0x9000, scoped, tag = 'internal scratch']
  %s0 = inlined_call_operand.vmem [shape: f32[32,4], index: 0, kind: input, shape index: {}]
  %s1 = inlined_call_operand.vmem [shape: f32[4,32], index: 1, kind: input, shape index: {}]
  %s2 = inlined_call_operand.vmem [shape: f32[1,32], index: 2, kind: input, shape index: {}]
  %s3 = inlined_call_operand.vmem [shape: bf16[16,32], index: 3, kind: input, shape index: {}]
  %s4 = inlined_call_operand.hbm [shape: bf16[16,32], index: 4, kind: output, shape index: {}]
  %s5 = sld [smem:[#allocation0]]
  $region49: #{tpu_custom_call.1} parent=0
    _
  %s7 = ssub.s32 1, %s5
  %s8 = scalar_select 0, %s7, %s5
  $region1: #{tpu_custom_call.1} parent=0
    #allocation2 [shape = 'u8[4096]{0}', space=vmem, size = 0x1000, scoped, tag = 'output window, operand 0']
    #allocation3 [shape = 's32[2]{0}', space=sflag, size = 0x8, scoped, tag = 'scoped memory for tpu_custom_call.1']
    %9 = vsyncpa [#allocation3], 0
    %s10 = scalar_lea.sflag [#allocation3], 1
    %11 = vsyncpa %s10, 0
    loop: start=0, step=1, limit=4
    $region2: #{tpu_custom_call.1} parent=1 // loop_pre_header
      _
    $region3: #{tpu_custom_call.1} parent=1 // loop_header
      %s13 = sphi 0, %s17
      %p14 = scmp.ge.s32.totalorder %s13, 4
      %s21 = sphi 0, %s21
      %s23 = sphi 0, %s21
      %s24 = sphi 0, %s23
      %s38 = sphi 0, %s24
      %s42 = sphi 0, %s42
      %s44 = sphi 0, %s42
      %s45 = sphi 0, %s44
      %s59 = sphi 0, %s45
      %s63 = sphi 0, %s63
      %s65 = sphi 0, %s63
      %s66 = sphi 0, %s65
      %s80 = sphi 0, %s66
      %s86 = sphi 0, %s88
      %s89 = sphi 0, %s86
      %s90 = sphi 0, %s89
      %s106 = sphi 0, %s90
      %s112 = sphi 0, %s114
      %s115 = sphi 0, %s112
      %s116 = sphi 0, %s115
      %s132 = sphi 0, %s116
    $region4: #{tpu_custom_call.1} parent=1 // loop_header_branch
      %16 = sbr.rel (%p14) target = $region8
    $region5: #{tpu_custom_call.1} parent=1 // loop_body
      %s18 = ssub.s32 %s13, 1
      %s19 = ssub.s32 %s13, 2
      %s20 = sadd.s32 %s13, 1
      %s22 = sadd.s32 %s21, 1
      %p25 = scmp.eq.s32.totalorder %s13, 1
      %p26 = scmp.ne.s32.totalorder %s21, %s23
      %p27 = scmp.eq.s32.totalorder %s13, 0
      %p28 = por %p26, %p27
      %p29 = scmp.ne.s32.totalorder %s21, %s23
      %p30 = scmp.eq.s32.totalorder %s18, 1
      %p31 = por %p29, %p30
      %p32 = scmp.ne.s32.totalorder %s23, %s24
      %p33 = scmp.eq.s32.totalorder %s18, 0
      %p34 = por %p32, %p33
      %p35 = scmp.ne.s32.totalorder %s23, %s24
      %p36 = scmp.eq.s32.totalorder %s19, 1
      %p37 = por %p35, %p36
      %p39 = scmp.ne.s32.totalorder %s24, %s38
      %p40 = scmp.eq.s32.totalorder %s19, 0
      %p41 = por %p39, %p40
      %s43 = sadd.s32 %s42, 1
      %p46 = scmp.eq.s32.totalorder %s13, 1
      %p47 = scmp.ne.s32.totalorder %s42, %s44
      %p48 = scmp.eq.s32.totalorder %s13, 0
      %p49 = por %p47, %p48
      %p50 = scmp.ne.s32.totalorder %s42, %s44
      %p51 = scmp.eq.s32.totalorder %s18, 1
      %p52 = por %p50, %p51
      %p53 = scmp.ne.s32.totalorder %s44, %s45
      %p54 = scmp.eq.s32.totalorder %s18, 0
      %p55 = por %p53, %p54
      %p56 = scmp.ne.s32.totalorder %s44, %s45
      %p57 = scmp.eq.s32.totalorder %s19, 1
      %p58 = por %p56, %p57
      %p60 = scmp.ne.s32.totalorder %s45, %s59
      %p61 = scmp.eq.s32.totalorder %s19, 0
      %p62 = por %p60, %p61
      %s64 = sadd.s32 %s63, 1
      %p67 = scmp.eq.s32.totalorder %s13, 1
      %p68 = scmp.ne.s32.totalorder %s63, %s65
      %p69 = scmp.eq.s32.totalorder %s13, 0
      %p70 = por %p68, %p69
      %p71 = scmp.ne.s32.totalorder %s63, %s65
      %p72 = scmp.eq.s32.totalorder %s18, 1
      %p73 = por %p71, %p72
      %p74 = scmp.ne.s32.totalorder %s65, %s66
      %p75 = scmp.eq.s32.totalorder %s18, 0
      %p76 = por %p74, %p75
      %p77 = scmp.ne.s32.totalorder %s65, %s66
      %p78 = scmp.eq.s32.totalorder %s19, 1
      %p79 = por %p77, %p78
      %p81 = scmp.ne.s32.totalorder %s66, %s80
      %p82 = scmp.eq.s32.totalorder %s19, 0
      %p83 = por %p81, %p82
      %s84 = ssub.s32 %s13, %s20
      %p85 = scmp.eq.s32.totalorder %s84, 0
      %s87 = sadd.s32 %s86, 1
      %s88 = scalar_select %p85, %s86, %s87
      %p91 = pneg %p85
      %p92 = scmp.eq.s32.totalorder %s13, 1
      %p93 = por %p91, %p92
      %p94 = scmp.ne.s32.totalorder %s86, %s89
      %p95 = scmp.eq.s32.totalorder %s13, 0
      %p96 = por %p94, %p95
      %p97 = scmp.ne.s32.totalorder %s86, %s89
      %p98 = scmp.eq.s32.totalorder %s18, 1
      %p99 = por %p97, %p98
      %p100 = scmp.ne.s32.totalorder %s89, %s90
      %p101 = scmp.eq.s32.totalorder %s18, 0
      %p102 = por %p100, %p101
      %p103 = scmp.ne.s32.totalorder %s89, %s90
      %p104 = scmp.eq.s32.totalorder %s19, 1
      %p105 = por %p103, %p104
      %p107 = scmp.ne.s32.totalorder %s90, %s106
      %p108 = scmp.eq.s32.totalorder %s19, 0
      %p109 = por %p107, %p108
      %s110 = ssub.s32 %s13, %s20
      %p111 = scmp.eq.s32.totalorder %s110, 0
      %s113 = sadd.s32 %s112, 1
      %s114 = scalar_select %p111, %s112, %s113
      %p117 = pneg %p111
      %p118 = scmp.eq.s32.totalorder %s13, 1
      %p119 = por %p117, %p118
      %p120 = scmp.ne.s32.totalorder %s112, %s115
      %p121 = scmp.eq.s32.totalorder %s13, 0
      %p122 = por %p120, %p121
      %p123 = scmp.ne.s32.totalorder %s112, %s115
      %p124 = scmp.eq.s32.totalorder %s18, 1
      %p125 = por %p123, %p124
      %p126 = scmp.ne.s32.totalorder %s115, %s116
      %p127 = scmp.eq.s32.totalorder %s18, 0
      %p128 = por %p126, %p127
      %p129 = scmp.ne.s32.totalorder %s115, %s116
      %p130 = scmp.eq.s32.totalorder %s19, 1
      %p131 = por %p129, %p130
      %p133 = scmp.ne.s32.totalorder %s116, %s132
      %p134 = scmp.eq.s32.totalorder %s19, 0
      %p135 = por %p133, %p134
      %p136 = scmp.le.s32.totalorder 1, %s13
      %p137 = scmp.lt.s32.totalorder %s13, 3
      %p138 = pnand %p136, %p137
      %p139 = pneg %p138
      // Predicated region
      $region9: #{tpu_custom_call.1} parent=5 // pred_check
        _
      $region10: #{tpu_custom_call.1} parent=5 // pred_check_branch
        %141 = sbr.rel (%p138) target = $region12
      $region11: #{tpu_custom_call.1} parent=5 // pred_region
        %s142 = ssub.s32 %s13, 1
        // Predicated region
        $region13: #{tpu_custom_call.1} parent=11 // pred_check
          %p143 = pneg %p34
        $region14: #{tpu_custom_call.1} parent=11 // pred_check_branch
          %145 = sbr.rel (%p143) target = $region16
        $region15: #{tpu_custom_call.1} parent=11 // pred_region
          _
        $region16: #{tpu_custom_call.1} parent=11 // pred_fallthru
          _
        // Predicated region
        $region17: #{tpu_custom_call.1} parent=11 // pred_check
          %p146 = pneg %p55
        $region18: #{tpu_custom_call.1} parent=11 // pred_check_branch
          %148 = sbr.rel (%p146) target = $region20
        $region19: #{tpu_custom_call.1} parent=11 // pred_region
          _
        $region20: #{tpu_custom_call.1} parent=11 // pred_fallthru
          _
        // Predicated region
        $region21: #{tpu_custom_call.1} parent=11 // pred_check
          %p149 = pneg %p76
        $region22: #{tpu_custom_call.1} parent=11 // pred_check_branch
          %151 = sbr.rel (%p149) target = $region24
        $region23: #{tpu_custom_call.1} parent=11 // pred_region
          _
        $region24: #{tpu_custom_call.1} parent=11 // pred_fallthru
          _
      $region12: #{tpu_custom_call.1} parent=5 // pred_fallthru
        _
      %p152 = scmp.lt.s32.totalorder %s13, 2
      // Predicated region
      $region25: #{tpu_custom_call.1} parent=5 // pred_check
        %p153 = pneg %p152
      $region26: #{tpu_custom_call.1} parent=5 // pred_check_branch
        %155 = sbr.rel (%p153) target = $region28
      $region27: #{tpu_custom_call.1} parent=5 // pred_region
        // Predicated region
        $region29: #{tpu_custom_call.1} parent=27 // pred_check
          %p156 = pneg %p96
        $region30: #{tpu_custom_call.1} parent=27 // pred_check_branch
          %158 = sbr.rel (%p156) target = $region32
        $region31: #{tpu_custom_call.1} parent=27 // pred_region
          %p159 = scmp.lt.s32.totalorder %s13, 1
          %s160 = scalar_select %p159, %s13, 1
          %s161 = smul.addr %s160, 4
          %s162 = scalar_lea.vmem %s3, %s161
        $region32: #{tpu_custom_call.1} parent=27 // pred_fallthru
          _
      $region28: #{tpu_custom_call.1} parent=5 // pred_fallthru
        _
      %p163 = scmp.le.s32.totalorder 1, %s13
      %p164 = scmp.lt.s32.totalorder %s13, 3
      %p165 = pnand %p163, %p164
      %p166 = pneg %p165
      // Predicated region
      $region33: #{tpu_custom_call.1} parent=5 // pred_check
        _
      $region34: #{tpu_custom_call.1} parent=5 // pred_check_branch
        %168 = sbr.rel (%p165) target = $region36
      $region35: #{tpu_custom_call.1} parent=5 // pred_region
        %s169 = ssub.s32 %s13, 1
        %p170 = pneg %p34
        %p171 = pneg %p31
        %p172 = pneg %p55
        %p173 = pneg %p52
        %p174 = pneg %p76
        %p175 = pneg %p73
        %p176 = scmp.lt.s32.totalorder %s18, 1
        %s177 = scalar_select %p176, %s18, 1
        %s178 = smul.addr %s177, 4
        %s179 = scalar_lea.vmem %s3, %s178
        %p180 = pneg %p102
        %p181 = pneg %p99
        %p182 = pneg %p128
        %p183 = pneg %p125
        %s184 = sand.u32 %s115, 1
        %s185 = scalar_lea.sflag [#allocation3], %s184
        %s186 = sand.u32 %s115, 1
        %s187 = smul.addr %s186, 4
        %s188 = scalar_lea.vmem [#allocation2], %s187
        %p189 = scmp.lt.s32.totalorder %s18, 1
        %s190 = scalar_select %p189, %s18, 1
        %s191 = smul.addr %s190, 4
        %s192 = scalar_lea.vmem %s3, %s191
        %v193 = vld [vmem:[%s192] sm:$0xf]
        %v194 = vunpack.c.l.bf16 %v193
        %v195 = vmul.f32 %v194, %v194
        %v196 = vld [vmem:[%s0] sm:$0xff]
        %v197 = vld [vmem:[%s0 + $0x8] sm:$0xff]
        %v198 = vld [vmem:[%s0 + $0x10] sm:$0xff]
        %v199 = vld [vmem:[%s0 + $0x18] sm:$0xff]
        %vm200 = vcmask 261120
        %v202 = vsel %vm200, %v195, 0
        %204 = vmatpush.msra.mxu0 0.0
        %205 = vmatpush.msra.mxu0 0.0
        %206 = vmatpush.msra.mxu0 0.0
        %207 = vmatpush.msra.mxu0 0.0
        %208 = vmatpush.msra.mxu0 0.0
        %209 = vmatpush.msra.mxu0 0.0
        %210 = vmatpush.msra.mxu0 0.0
        %211 = vmatpush.msra.mxu0 0.0
        %212 = vmatpush.msra.mxu0 0.0
        %213 = vmatpush.msra.mxu0 0.0
        %214 = vmatpush.msra.mxu0 0.0
        %215 = vmatpush.msra.mxu0 0.0
        %216 = vmatpush.msra.mxu0 %v199
        %217 = vmatpush.msra.mxu0 %v198
        %218 = vmatpush.msra.mxu0 %v197
        %219 = vmatpush.msra.mxu0 %v196
        %220 = vmatmul.f32.gmra.mxu0 %v202
        %v221 = vpop.f32.mrf.mxu0
        %v222 = vadd.f32 0.0, %v221
        %223 = vdwg.mxu0
        %v224 = vmul.f32 %v222, 0.125
        %v225 = vadd.f32 %v224, 1e-05
        %v226 = vrsqrt.pop %v225
        %v227 = vmul.f32 %v226, %v225
        %v228 = vmul.f32 %v227, %v226
        %v229 = vmul.f32 0.5, %v228
        %v230 = vsub.f32 1.5, %v229
        %v231 = vmul.f32 %v226, %v230
        %vm232 = vweird.f32 %v225
        %vm233 = vweird.f32 %v226
        %vm234 = vmor %vm232, %vm233
        %v235 = vsel %vm234, %v226, %v231
        %v236 = vld [vmem:[%s1] sm:$0xf]
        %vm237 = vcmask 31744
        %v239 = vsel %vm237, %v235, 0
        %vm241 = vcmask 1043456
        %v243 = vsel %vm241, %v236, 0
        %245 = vmatpush.msra.mxu0 0.0
        %246 = vmatpush.msra.mxu0 0.0
        %247 = vmatpush.msra.mxu0 0.0
        %248 = vmatpush.msra.mxu0 0.0
        %249 = vmatpush.msra.mxu0 0.0
        %250 = vmatpush.msra.mxu0 0.0
        %251 = vmatpush.msra.mxu0 0.0
        %252 = vmatpush.msra.mxu0 0.0
        %253 = vmatpush.msra.mxu0 0.0
        %254 = vmatpush.msra.mxu0 0.0
        %255 = vmatpush.msra.mxu0 0.0
        %256 = vmatpush.msra.mxu0 0.0
        %257 = vmatpush.msra.mxu0 0.0
        %258 = vmatpush.msra.mxu0 0.0
        %259 = vmatpush.msra.mxu0 0.0
        %260 = vmatpush.msra.mxu0 %v243
        %261 = vmatmul.f32.gmra.mxu0 %v239
        %v262 = vpop.f32.mrf.mxu0
        %v263 = vadd.f32 0.0, %v262
        %264 = vdwg.mxu0
        %v265 = vmul.f32 %v194, %v263
        %v266 = vld [vmem:[%s2] sm:$0x1]
        %v268 = vperm.slane %v266, 0
        %v270 = vmul.f32 %v265, %v268
        %v271 = vpack.c.bf16 %v270, %v270
        %vm272 = vcmask 257024
        %273 = vst.msk [vmem:[%s188] sm:$0xf] %vm272, %v271
        %s274 = sand.u32 %s115, 1
        %s275 = scalar_lea.sflag [#allocation3], %s274
        %s276 = sand.u32 %s115, 1
        %s277 = smul.addr %s276, 4
        %s278 = scalar_lea.vmem [#allocation2], %s277
        // Predicated region
        $region37: #{tpu_custom_call.1} parent=35 // pred_check
          %p279 = pneg %p125
        $region38: #{tpu_custom_call.1} parent=35 // pred_check_branch
          %281 = sbr.rel (%p279) target = $region40
        $region39: #{tpu_custom_call.1} parent=35 // pred_region
          %283 = vsyncadd %s275, 0
          %s284 = smul.addr %s18, 4
          %s285 = scalar_lea.hbm %s4, %s284
          %s287 = sshll.u32 %s278, 4
          %s288 = int_to_ptr.vmem [resolvable:$true] %s287
          %s289 = sshll.u32 %s285, 4
          %s290 = int_to_ptr.hbm [resolvable:$true] %s289
          %292 = dma.vmem_to_hbm [thread:$0]  %s288, 64, %s290, %s275
        $region40: #{tpu_custom_call.1} parent=35 // pred_fallthru
          _
      $region36: #{tpu_custom_call.1} parent=5 // pred_fallthru
        _
      %p293 = scmp.le.s32.totalorder 2, %s13
      // Predicated region
      $region41: #{tpu_custom_call.1} parent=5 // pred_check
        %p294 = pneg %p293
      $region42: #{tpu_custom_call.1} parent=5 // pred_check_branch
        %296 = sbr.rel (%p294) target = $region44
      $region43: #{tpu_custom_call.1} parent=5 // pred_region
        %s297 = ssub.s32 %s13, 2
        // Predicated region
        $region45: #{tpu_custom_call.1} parent=43 // pred_check
          %p298 = pneg %p131
        $region46: #{tpu_custom_call.1} parent=43 // pred_check_branch
          %300 = sbr.rel (%p298) target = $region48
        $region47: #{tpu_custom_call.1} parent=43 // pred_region
          %s301 = sand.u32 %s116, 1
          %s302 = scalar_lea.sflag [#allocation3], %s301
          %s303 = sand.u32 %s116, 1
          %s304 = smul.addr %s303, 4
          %s305 = scalar_lea.vmem [#allocation2], %s304
          %307 = dma.done %s302, 64
        $region48: #{tpu_custom_call.1} parent=43 // pred_fallthru
          _
      $region44: #{tpu_custom_call.1} parent=5 // pred_fallthru
        _
    $region6: #{tpu_custom_call.1} parent=1 // loop_footer
      %s17 = sadd.s32 1, %s13
    $region7: #{tpu_custom_call.1} parent=1 // loop_footer_branch
      %12 = sbr.rel target = $region3
    $region8: #{tpu_custom_call.1} parent=1 // loop_exit
      _
    %308 = vsyncpa [#allocation3], 1
    %s309 = scalar_lea.sflag [#allocation3], 1
    %310 = vsyncpa %s309, 1

</llo_original>
